<compile_context>
chip_gen: v7x
topology: tpu7x:2x2x1
jax: 0.10.0
libtpu: 0.0.40
codegen_flags: <defaults>
</compile_context>

<pallas_src>
import math
import functools

import jax
import jax.numpy as jnp
from jax.experimental import pallas as pl
from jax.experimental.pallas import tpu as pltpu

_NEG_INF = -1e30


def _layernorm(x, w, b, eps=1e-5):
    # x: (T, C) f32; w, b: (1, C) f32
    mu = jnp.mean(x, axis=-1, keepdims=True)
    var = jnp.mean((x - mu) * (x - mu), axis=-1, keepdims=True)
    return (x - mu) * jax.lax.rsqrt(var + eps) * w + b


def _gelu_tanh(x):
    # GPT-2 "new GELU" (tanh approximation), f32.
    c = math.sqrt(2.0 / math.pi)
    return 0.5 * x * (1.0 + jnp.tanh(c * (x + 0.044715 * x * x * x)))


def block_kernel(
    x_ref,     # (T, C) f32   -- one sequence per grid step
    vec_ref,   # (8, 4C) f32  -- packed LN params + biases (always f32)
    w_ref,     # (7C, 4C) bf16 -- packed weights (pre-transposed to (in, out))
    o_ref,     # (T, C)
    *, n_head: int,
):
    T, C = x_ref.shape
    hd = C // n_head
    scale = 1.0 / math.sqrt(hd)
    bf16 = jnp.bfloat16
    f32 = jnp.float32

    x = x_ref[...]                      # f32
    vec = vec_ref[...]                  # f32
    ln1_w = vec[0:1, :C]
    ln1_b = vec[1:2, :C]
    ln2_w = vec[2:3, :C]
    ln2_b = vec[3:4, :C]
    b_attnproj = vec[4:5, :C]
    b_mlpproj = vec[5:6, :C]
    b_qkv = vec[6:7, :3 * C]
    b_fc = vec[7:8, :]

    # Static, tile-aligned slices of the packed bf16 weight slab.
    w_fc = w_ref[0:C, :]                 # (C, 4C)
    w_qkv = w_ref[C:2 * C, :3 * C]       # (C, 3C)
    w_attnproj = w_ref[2 * C:3 * C, :C]  # (C, C)
    w_mlpproj = w_ref[3 * C:7 * C, :C]   # (4C, C)

    # ------------- attention branch: x1 = x + proj(attn(ln_1(x))) -------------
    h1 = _layernorm(x, ln1_w, ln1_b)                                   # f32
    qkv = jnp.dot(h1.astype(bf16), w_qkv,
                  preferred_element_type=f32) + b_qkv                  # (T, 3C) f32

    q = qkv[:, 0 * C:1 * C] * scale      # fold 1/sqrt(hd) into q
    k = qkv[:, 1 * C:2 * C]
    v = qkv[:, 2 * C:3 * C]

    # Head relayout: lane slices + leading-axis stack -> (H, T, hd).
    def split_heads(z):
        return jnp.concatenate(
            [z[None, :, hh * hd:(hh + 1) * hd] for hh in range(n_head)], axis=0)

    qh = split_heads(q).astype(bf16)
    kh = split_heads(k).astype(bf16)
    vh = split_heads(v).astype(bf16)

    # Batched over heads: 2 MXU pushes instead of 8.
    s = jnp.einsum('hqd,hkd->hqk', qh, kh, preferred_element_type=f32)  # (H,T,T)

    row = jax.lax.broadcasted_iota(jnp.int32, (T, T), 0)
    col = jax.lax.broadcasted_iota(jnp.int32, (T, T), 1)
    causal = (row >= col)[None]                                         # (1,T,T)

    s = jnp.where(causal, s, _NEG_INF)
    s = s - jnp.max(s, axis=-1, keepdims=True)                          # f32 softmax
    p = jnp.exp(s)
    p = p * pl.reciprocal(jnp.sum(p, axis=-1, keepdims=True), approx=True)

    y = jnp.einsum('hqk,hkd->hqd', p.astype(bf16), vh,
                   preferred_element_type=f32)                          # (H, T, hd)
    y_cat = jnp.concatenate([y[hh] for hh in range(n_head)], axis=-1)   # (T, C)

    attn = jnp.dot(y_cat.astype(bf16), w_attnproj,
                   preferred_element_type=f32) + b_attnproj
    x1 = x + attn

    # ------------- MLP branch: out = x1 + proj(gelu(fc(ln2(x1)))) -------------
    h2 = _layernorm(x1, ln2_w, ln2_b)
    fc = jnp.dot(h2.astype(bf16), w_fc, preferred_element_type=f32) + b_fc
    g = _gelu_tanh(fc)                                                  # f32
    mlp = jnp.dot(g.astype(bf16), w_mlpproj,
                  preferred_element_type=f32) + b_mlpproj

    o_ref[...] = (x1 + mlp).astype(o_ref.dtype)


def pack_block_params(params):
    """Pack params ONCE at init: 8 small vectors -> one f32 (8,4C) slab, the four
    weight matrices -> one bf16 (7C, 4C) slab with static, tile-aligned offsets."""
    C = params["ln1_w"].shape[-1]
    f32, bf16 = jnp.float32, jnp.bfloat16

    vec = jnp.zeros((8, 4 * C), f32)
    vec = vec.at[0, :C].set(params["ln1_w"].reshape(C).astype(f32))
    vec = vec.at[1, :C].set(params["ln1_b"].reshape(C).astype(f32))
    vec = vec.at[2, :C].set(params["ln2_w"].reshape(C).astype(f32))
    vec = vec.at[3, :C].set(params["ln2_b"].reshape(C).astype(f32))
    vec = vec.at[4, :C].set(params["b_attnproj"].reshape(C).astype(f32))
    vec = vec.at[5, :C].set(params["b_mlpproj"].reshape(C).astype(f32))
    vec = vec.at[6, :3 * C].set(params["b_qkv"].reshape(3 * C).astype(f32))
    vec = vec.at[7, :4 * C].set(params["b_fc"].reshape(4 * C).astype(f32))

    w_all = jnp.zeros((7 * C, 4 * C), bf16)
    w_all = w_all.at[0:C, :].set(params["w_fc"].astype(bf16))
    w_all = w_all.at[C:2 * C, :3 * C].set(params["w_qkv"].astype(bf16))
    w_all = w_all.at[2 * C:3 * C, :C].set(params["w_attnproj"].astype(bf16))
    w_all = w_all.at[3 * C:7 * C, :C].set(params["w_mlpproj"].astype(bf16))
    return {"vec": vec, "w_all": w_all}


def gpt_block(x, packed, *, n_head):
    B, T, C = x.shape
    assert C % n_head == 0
    assert T % 8 == 0  # one sequence = whole f32 sublane tiles

    x2d = x.reshape(B * T, C)
    vec, w_all = packed["vec"], packed["w_all"]

    out2d = pl.pallas_call(
        functools.partial(block_kernel, n_head=n_head),
        out_shape=jax.ShapeDtypeStruct((B * T, C), x.dtype),
        grid=(B,),
        in_specs=[
            pl.BlockSpec((T, C), lambda b: (b, 0)),           # per-batch sequence
            pl.BlockSpec(vec.shape, lambda b: (0, 0)),        # resident param slab
            pl.BlockSpec(w_all.shape, lambda b: (0, 0)),      # resident weight slab
        ],
        out_specs=pl.BlockSpec((T, C), lambda b: (b, 0)),
        compiler_params=pltpu.CompilerParams(
            dimension_semantics=("parallel",)),               # v7x: 2 TensorCores
    )(x2d, vec, w_all)
    return out2d.reshape(B, T, C)


def block_ref(x, params, *, n_head):
    """Pure-JAX reference mirroring the PyTorch Block forward (f32 throughout)."""
    B, T, C = x.shape
    hd = C // n_head

    def ln(z, w, b, eps=1e-5):
        mu = jnp.mean(z, axis=-1, keepdims=True)
        var = jnp.mean((z - mu) ** 2, axis=-1, keepdims=True)
        return (z - mu) / jnp.sqrt(var + eps) * w + b

    h = ln(x, params["ln1_w"], params["ln1_b"])
    qkv = h @ params["w_qkv"] + params["b_qkv"]
    q, k, v = jnp.split(qkv, 3, axis=-1)
    q = q.reshape(B, T, n_head, hd).transpose(0, 2, 1, 3)
    k = k.reshape(B, T, n_head, hd).transpose(0, 2, 1, 3)
    v = v.reshape(B, T, n_head, hd).transpose(0, 2, 1, 3)
    att = (q @ jnp.swapaxes(k, -1, -2)) / math.sqrt(hd)
    mask = jnp.tril(jnp.ones((T, T), bool))
    att = jnp.where(mask, att, -jnp.inf)
    att = jax.nn.softmax(att, axis=-1)
    y = (att @ v).transpose(0, 2, 1, 3).reshape(B, T, C)
    x = x + y @ params["w_attnproj"] + params["b_attnproj"]
    h2 = ln(x, params["ln2_w"], params["ln2_b"])
    mlp = (_gelu_tanh(h2 @ params["w_fc"] + params["b_fc"])
           @ params["w_mlpproj"] + params["b_mlpproj"])
    return x + mlp


def init_params(key, n_embed):
    C = n_embed
    ks = jax.random.split(key, 10)
    std = 0.02
    # PyTorch nn.Linear weights are (out, in); stored pre-transposed as (in, out).
    return {
        "ln1_w": 1.0 + 0.1 * jax.random.normal(ks[0], (C,), jnp.float32),
        "ln1_b": 0.1 * jax.random.normal(ks[1], (C,), jnp.float32),
        "w_qkv": std * jax.random.normal(ks[2], (C, 3 * C), jnp.float32),
        "b_qkv": 0.1 * jax.random.normal(ks[3], (3 * C,), jnp.float32),
        "w_attnproj": std * jax.random.normal(ks[4], (C, C), jnp.float32),
        "b_attnproj": 0.1 * jax.random.normal(ks[5], (C,), jnp.float32),
        "ln2_w": 1.0 + 0.1 * jax.random.normal(ks[6], (C,), jnp.float32),
        "ln2_b": 0.1 * jax.random.normal(ks[7], (C,), jnp.float32),
        "w_fc": std * jax.random.normal(ks[8], (C, 4 * C), jnp.float32),
        "b_fc": jnp.zeros((4 * C,), jnp.float32),
        "w_mlpproj": std * jax.random.normal(ks[9], (4 * C, C), jnp.float32),
        "b_mlpproj": jnp.zeros((C,), jnp.float32),
    }


if __name__ == "__main__":
    B, T, C, N_HEAD = 2, 8, 32, 4

    key = jax.random.PRNGKey(0)
    kx, kp = jax.random.split(key)
    x = jax.random.normal(kx, (B, T, C), jnp.float32)
    params = init_params(kp, C)
    packed = pack_block_params(params)   # packed ONCE at init, reused every forward

    out = gpt_block(x, packed, n_head=N_HEAD)
    jax.block_until_ready(out)
    assert out.shape == (B, T, C) and out.dtype == jnp.float32

    ref = block_ref(x, params, n_head=N_HEAD)
    err = float(jnp.max(jnp.abs(out - ref)))
    assert err < 1e-2, f"mismatch vs reference: max abs err = {err}"
    print("KERNEL_OK")
</pallas_src>

<mosaic_0001>
module attributes {stable_mosaic.version = 11 : i64} {
  func.func @block_kernel(%arg0: i32, %arg1: memref<8x32xf32, #tpu.memory_space<vmem>>, %arg2: memref<8x128xf32, #tpu.memory_space<vmem>>, %arg3: memref<224x128xbf16, #tpu.memory_space<vmem>>, %arg4: memref<8x32xf32, #tpu.memory_space<vmem>>) attributes {dimension_semantics = [#tpu.dimension_semantics<parallel>], iteration_bounds = array<i64: 2>, scalar_prefetch = 0 : i64, scratch_operands = 0 : i64, tpu.core_type = #tpu.core_type<tc>, window_params = [{transform_indices = @transform_0, window_bounds = array<i64: 8, 32>}, {pipeline_mode = #tpu.pipeline_mode<synchronous>, transform_indices = @transform_1, window_bounds = array<i64: 8, 128>}, {pipeline_mode = #tpu.pipeline_mode<synchronous>, transform_indices = @transform_2, window_bounds = array<i64: 224, 128>}, {transform_indices = @transform_3, window_bounds = array<i64: 8, 32>}]} {
    %c0 = arith.constant 0 : index
    %c0_0 = arith.constant 0 : index
    %0 = vector.load %arg1[%c0, %c0_0] : memref<8x32xf32, #tpu.memory_space<vmem>>, vector<8x32xf32>
    %c0_1 = arith.constant 0 : index
    %c0_2 = arith.constant 0 : index
    %1 = vector.load %arg2[%c0_1, %c0_2] : memref<8x128xf32, #tpu.memory_space<vmem>>, vector<8x128xf32>
    %2 = vector.extract_strided_slice %1 {offsets = [0, 0], sizes = [1, 32], strides = [1, 1]} : vector<8x128xf32> to vector<1x32xf32>
    %3 = vector.extract_strided_slice %1 {offsets = [1, 0], sizes = [1, 32], strides = [1, 1]} : vector<8x128xf32> to vector<1x32xf32>
    %4 = vector.extract_strided_slice %1 {offsets = [2, 0], sizes = [1, 32], strides = [1, 1]} : vector<8x128xf32> to vector<1x32xf32>
    %5 = vector.extract_strided_slice %1 {offsets = [3, 0], sizes = [1, 32], strides = [1, 1]} : vector<8x128xf32> to vector<1x32xf32>
    %6 = vector.extract_strided_slice %1 {offsets = [4, 0], sizes = [1, 32], strides = [1, 1]} : vector<8x128xf32> to vector<1x32xf32>
    %7 = vector.extract_strided_slice %1 {offsets = [5, 0], sizes = [1, 32], strides = [1, 1]} : vector<8x128xf32> to vector<1x32xf32>
    %8 = vector.extract_strided_slice %1 {offsets = [6, 0], sizes = [1, 96], strides = [1, 1]} : vector<8x128xf32> to vector<1x96xf32>
    %9 = vector.extract_strided_slice %1 {offsets = [7, 0], sizes = [1, 128], strides = [1, 1]} : vector<8x128xf32> to vector<1x128xf32>
    %c0_3 = arith.constant 0 : index
    %c0_4 = arith.constant 0 : index
    %10 = vector.load %arg3[%c0_3, %c0_4] : memref<224x128xbf16, #tpu.memory_space<vmem>>, vector<32x128xbf16>
    %c32 = arith.constant 32 : index
    %c0_5 = arith.constant 0 : index
    %11 = vector.load %arg3[%c32, %c0_5] : memref<224x128xbf16, #tpu.memory_space<vmem>>, vector<32x96xbf16>
    %c64 = arith.constant 64 : index
    %c0_6 = arith.constant 0 : index
    %12 = vector.load %arg3[%c64, %c0_6] : memref<224x128xbf16, #tpu.memory_space<vmem>>, vector<32x32xbf16>
    %c96 = arith.constant 96 : index
    %c0_7 = arith.constant 0 : index
    %13 = vector.load %arg3[%c96, %c0_7] : memref<224x128xbf16, #tpu.memory_space<vmem>>, vector<128x32xbf16>
    %cst = arith.constant dense<0.000000e+00> : vector<8xf32>
    %14 = vector.multi_reduction <add>, %0, %cst [1] : vector<8x32xf32> to vector<8xf32>
    %15 = vector.shape_cast %14 : vector<8xf32> to vector<8x1xf32>
    %cst_8 = arith.constant 3.200000e+01 : f32
    %16 = vector.broadcast %cst_8 : f32 to vector<8x1xf32>
    %17 = arith.divf %15, %16 : vector<8x1xf32>
    %18 = vector.broadcast %17 : vector<8x1xf32> to vector<8x32xf32>
    %19 = arith.subf %0, %18 : vector<8x32xf32>
    %20 = vector.broadcast %17 : vector<8x1xf32> to vector<8x32xf32>
    %21 = arith.subf %0, %20 : vector<8x32xf32>
    %22 = arith.mulf %19, %21 : vector<8x32xf32>
    %cst_9 = arith.constant dense<0.000000e+00> : vector<8xf32>
    %23 = vector.multi_reduction <add>, %22, %cst_9 [1] : vector<8x32xf32> to vector<8xf32>
    %24 = vector.shape_cast %23 : vector<8xf32> to vector<8x1xf32>
    %cst_10 = arith.constant 3.200000e+01 : f32
    %25 = vector.broadcast %cst_10 : f32 to vector<8x1xf32>
    %26 = arith.divf %24, %25 : vector<8x1xf32>
    %27 = vector.broadcast %17 : vector<8x1xf32> to vector<8x32xf32>
    %28 = arith.subf %0, %27 : vector<8x32xf32>
    %cst_11 = arith.constant 9.99999974E-6 : f32
    %29 = vector.broadcast %cst_11 : f32 to vector<8x1xf32>
    %30 = arith.addf %26, %29 : vector<8x1xf32>
    %31 = math.rsqrt %30 : vector<8x1xf32>
    %32 = vector.broadcast %31 : vector<8x1xf32> to vector<8x32xf32>
    %33 = arith.mulf %28, %32 : vector<8x32xf32>
    %34 = vector.broadcast %2 : vector<1x32xf32> to vector<8x32xf32>
    %35 = arith.mulf %33, %34 : vector<8x32xf32>
    %36 = vector.broadcast %3 : vector<1x32xf32> to vector<8x32xf32>
    %37 = arith.addf %35, %36 : vector<8x32xf32>
    %38 = arith.truncf %37 : vector<8x32xf32> to vector<8x32xbf16>
    %cst_12 = arith.constant dense<0.000000e+00> : vector<8x96xf32>
    %39 = tpu.matmul %38, %11, %cst_12 {dimension_numbers = #tpu.dot_dimension_numbers<[1], [0], [0], [1], [0, 0, 1, 1], [], []>} : vector<8x32xbf16>, vector<32x96xbf16>, vector<8x96xf32> -> vector<8x96xf32>
    %40 = vector.broadcast %8 : vector<1x96xf32> to vector<8x96xf32>
    %41 = arith.addf %39, %40 : vector<8x96xf32>
    %42 = vector.extract_strided_slice %41 {offsets = [0, 0], sizes = [8, 32], strides = [1, 1]} : vector<8x96xf32> to vector<8x32xf32>
    %cst_13 = arith.constant 0.353553385 : f32
    %43 = vector.broadcast %cst_13 : f32 to vector<8x32xf32>
    %44 = arith.mulf %42, %43 : vector<8x32xf32>
    %45 = vector.extract_strided_slice %41 {offsets = [0, 32], sizes = [8, 32], strides = [1, 1]} : vector<8x96xf32> to vector<8x32xf32>
    %46 = vector.extract_strided_slice %41 {offsets = [0, 64], sizes = [8, 32], strides = [1, 1]} : vector<8x96xf32> to vector<8x32xf32>
    %47 = vector.extract_strided_slice %44 {offsets = [0, 0], sizes = [8, 8], strides = [1, 1]} : vector<8x32xf32> to vector<8x8xf32>
    %48 = vector.shape_cast %47 : vector<8x8xf32> to vector<1x8x8xf32>
    %49 = vector.extract_strided_slice %44 {offsets = [0, 8], sizes = [8, 8], strides = [1, 1]} : vector<8x32xf32> to vector<8x8xf32>
    %50 = vector.shape_cast %49 : vector<8x8xf32> to vector<1x8x8xf32>
    %51 = vector.extract_strided_slice %44 {offsets = [0, 16], sizes = [8, 8], strides = [1, 1]} : vector<8x32xf32> to vector<8x8xf32>
    %52 = vector.shape_cast %51 : vector<8x8xf32> to vector<1x8x8xf32>
    %53 = vector.extract_strided_slice %44 {offsets = [0, 24], sizes = [8, 8], strides = [1, 1]} : vector<8x32xf32> to vector<8x8xf32>
    %54 = vector.shape_cast %53 : vector<8x8xf32> to vector<1x8x8xf32>
    %55 = tpu.concatenate %48, %50, %52, %54 in 0 : vector<1x8x8xf32>, vector<1x8x8xf32>, vector<1x8x8xf32>, vector<1x8x8xf32> -> vector<4x8x8xf32>
    %56 = arith.truncf %55 : vector<4x8x8xf32> to vector<4x8x8xbf16>
    %57 = vector.extract_strided_slice %45 {offsets = [0, 0], sizes = [8, 8], strides = [1, 1]} : vector<8x32xf32> to vector<8x8xf32>
    %58 = vector.shape_cast %57 : vector<8x8xf32> to vector<1x8x8xf32>
    %59 = vector.extract_strided_slice %45 {offsets = [0, 8], sizes = [8, 8], strides = [1, 1]} : vector<8x32xf32> to vector<8x8xf32>
    %60 = vector.shape_cast %59 : vector<8x8xf32> to vector<1x8x8xf32>
    %61 = vector.extract_strided_slice %45 {offsets = [0, 16], sizes = [8, 8], strides = [1, 1]} : vector<8x32xf32> to vector<8x8xf32>
    %62 = vector.shape_cast %61 : vector<8x8xf32> to vector<1x8x8xf32>
    %63 = vector.extract_strided_slice %45 {offsets = [0, 24], sizes = [8, 8], strides = [1, 1]} : vector<8x32xf32> to vector<8x8xf32>
    %64 = vector.shape_cast %63 : vector<8x8xf32> to vector<1x8x8xf32>
    %65 = tpu.concatenate %58, %60, %62, %64 in 0 : vector<1x8x8xf32>, vector<1x8x8xf32>, vector<1x8x8xf32>, vector<1x8x8xf32> -> vector<4x8x8xf32>
    %66 = arith.truncf %65 : vector<4x8x8xf32> to vector<4x8x8xbf16>
    %67 = vector.extract_strided_slice %46 {offsets = [0, 0], sizes = [8, 8], strides = [1, 1]} : vector<8x32xf32> to vector<8x8xf32>
    %68 = vector.shape_cast %67 : vector<8x8xf32> to vector<1x8x8xf32>
    %69 = vector.extract_strided_slice %46 {offsets = [0, 8], sizes = [8, 8], strides = [1, 1]} : vector<8x32xf32> to vector<8x8xf32>
    %70 = vector.shape_cast %69 : vector<8x8xf32> to vector<1x8x8xf32>
    %71 = vector.extract_strided_slice %46 {offsets = [0, 16], sizes = [8, 8], strides = [1, 1]} : vector<8x32xf32> to vector<8x8xf32>
    %72 = vector.shape_cast %71 : vector<8x8xf32> to vector<1x8x8xf32>
    %73 = vector.extract_strided_slice %46 {offsets = [0, 24], sizes = [8, 8], strides = [1, 1]} : vector<8x32xf32> to vector<8x8xf32>
    %74 = vector.shape_cast %73 : vector<8x8xf32> to vector<1x8x8xf32>
    %75 = tpu.concatenate %68, %70, %72, %74 in 0 : vector<1x8x8xf32>, vector<1x8x8xf32>, vector<1x8x8xf32>, vector<1x8x8xf32> -> vector<4x8x8xf32>
    %76 = arith.truncf %75 : vector<4x8x8xf32> to vector<4x8x8xbf16>
    "tpu.trace_start"() <{level = 10 : i32, message = "hqd,hkd->hqk"}> : () -> ()
    %cst_14 = arith.constant dense<0.000000e+00> : vector<4x8x8xf32>
    %77 = tpu.matmul %56, %66, %cst_14 {dimension_numbers = #tpu.dot_dimension_numbers<[2], [2], [1], [1], [0, 0, 0, 1, 1, 1], [0], [0]>} : vector<4x8x8xbf16>, vector<4x8x8xbf16>, vector<4x8x8xf32> -> vector<4x8x8xf32>
    "tpu.trace_stop"() : () -> ()
    %78 = tpu.iota {dimensions = array<i32: 0>} : vector<8x8xi32>
    %79 = tpu.iota {dimensions = array<i32: 1>} : vector<8x8xi32>
    %80 = arith.cmpi sge, %78, %79 : vector<8x8xi32>
    %81 = vector.shape_cast %80 : vector<8x8xi1> to vector<1x8x8xi1>
    %cst_15 = arith.constant -1.000000e+30 : f32
    %82 = vector.shape_cast %81 : vector<1x8x8xi1> to vector<1x8x8xi1>
    %83 = vector.broadcast %82 : vector<1x8x8xi1> to vector<4x8x8xi1>
    %84 = vector.broadcast %cst_15 : f32 to vector<4x8x8xf32>
    %85 = arith.select %83, %77, %84 : vector<4x8x8xi1>, vector<4x8x8xf32>
    %cst_16 = arith.constant dense<0xFF800000> : vector<4x8xf32>
    %86 = vector.multi_reduction <maximumf>, %85, %cst_16 [2] : vector<4x8x8xf32> to vector<4x8xf32>
    %87 = vector.shape_cast %86 : vector<4x8xf32> to vector<4x8x1xf32>
    %88 = vector.broadcast %87 : vector<4x8x1xf32> to vector<4x8x8xf32>
    %89 = arith.subf %85, %88 : vector<4x8x8xf32>
    %90 = math.exp %89 : vector<4x8x8xf32>
    %cst_17 = arith.constant dense<0.000000e+00> : vector<4x8xf32>
    %91 = vector.multi_reduction <add>, %90, %cst_17 [2] : vector<4x8x8xf32> to vector<4x8xf32>
    %92 = vector.shape_cast %91 : vector<4x8xf32> to vector<4x8x1xf32>
    %93 = tpu.reciprocal %92 {approx = true} : vector<4x8x1xf32> -> vector<4x8x1xf32>
    %94 = vector.broadcast %93 : vector<4x8x1xf32> to vector<4x8x8xf32>
    %95 = arith.mulf %90, %94 : vector<4x8x8xf32>
    %96 = arith.truncf %95 : vector<4x8x8xf32> to vector<4x8x8xbf16>
    "tpu.trace_start"() <{level = 10 : i32, message = "hqk,hkd->hqd"}> : () -> ()
    %cst_18 = arith.constant dense<0.000000e+00> : vector<4x8x8xf32>
    %97 = tpu.matmul %96, %76, %cst_18 {dimension_numbers = #tpu.dot_dimension_numbers<[2], [1], [1], [2], [0, 0, 0, 1, 1, 2], [0], [0]>} : vector<4x8x8xbf16>, vector<4x8x8xbf16>, vector<4x8x8xf32> -> vector<4x8x8xf32>
    "tpu.trace_stop"() : () -> ()
    %98 = vector.extract_strided_slice %97 {offsets = [0, 0, 0], sizes = [1, 8, 8], strides = [1, 1, 1]} : vector<4x8x8xf32> to vector<1x8x8xf32>
    %99 = vector.shape_cast %98 : vector<1x8x8xf32> to vector<8x8xf32>
    %100 = vector.extract_strided_slice %97 {offsets = [1, 0, 0], sizes = [1, 8, 8], strides = [1, 1, 1]} : vector<4x8x8xf32> to vector<1x8x8xf32>
    %101 = vector.shape_cast %100 : vector<1x8x8xf32> to vector<8x8xf32>
    %102 = vector.extract_strided_slice %97 {offsets = [2, 0, 0], sizes = [1, 8, 8], strides = [1, 1, 1]} : vector<4x8x8xf32> to vector<1x8x8xf32>
    %103 = vector.shape_cast %102 : vector<1x8x8xf32> to vector<8x8xf32>
    %104 = vector.extract_strided_slice %97 {offsets = [3, 0, 0], sizes = [1, 8, 8], strides = [1, 1, 1]} : vector<4x8x8xf32> to vector<1x8x8xf32>
    %105 = vector.shape_cast %104 : vector<1x8x8xf32> to vector<8x8xf32>
    %106 = tpu.concatenate %99, %101, %103, %105 in 1 : vector<8x8xf32>, vector<8x8xf32>, vector<8x8xf32>, vector<8x8xf32> -> vector<8x32xf32>
    %107 = arith.truncf %106 : vector<8x32xf32> to vector<8x32xbf16>
    %cst_19 = arith.constant dense<0.000000e+00> : vector<8x32xf32>
    %108 = tpu.matmul %107, %12, %cst_19 {dimension_numbers = #tpu.dot_dimension_numbers<[1], [0], [0], [1], [0, 0, 1, 1], [], []>} : vector<8x32xbf16>, vector<32x32xbf16>, vector<8x32xf32> -> vector<8x32xf32>
    %109 = vector.broadcast %6 : vector<1x32xf32> to vector<8x32xf32>
    %110 = arith.addf %108, %109 : vector<8x32xf32>
    %111 = arith.addf %0, %110 : vector<8x32xf32>
    %cst_20 = arith.constant dense<0.000000e+00> : vector<8xf32>
    %112 = vector.multi_reduction <add>, %111, %cst_20 [1] : vector<8x32xf32> to vector<8xf32>
    %113 = vector.shape_cast %112 : vector<8xf32> to vector<8x1xf32>
    %cst_21 = arith.constant 3.200000e+01 : f32
    %114 = vector.broadcast %cst_21 : f32 to vector<8x1xf32>
    %115 = arith.divf %113, %114 : vector<8x1xf32>
    %116 = vector.broadcast %115 : vector<8x1xf32> to vector<8x32xf32>
    %117 = arith.subf %111, %116 : vector<8x32xf32>
    %118 = vector.broadcast %115 : vector<8x1xf32> to vector<8x32xf32>
    %119 = arith.subf %111, %118 : vector<8x32xf32>
    %120 = arith.mulf %117, %119 : vector<8x32xf32>
    %cst_22 = arith.constant dense<0.000000e+00> : vector<8xf32>
    %121 = vector.multi_reduction <add>, %120, %cst_22 [1] : vector<8x32xf32> to vector<8xf32>
    %122 = vector.shape_cast %121 : vector<8xf32> to vector<8x1xf32>
    %cst_23 = arith.constant 3.200000e+01 : f32
    %123 = vector.broadcast %cst_23 : f32 to vector<8x1xf32>
    %124 = arith.divf %122, %123 : vector<8x1xf32>
    %125 = vector.broadcast %115 : vector<8x1xf32> to vector<8x32xf32>
    %126 = arith.subf %111, %125 : vector<8x32xf32>
    %cst_24 = arith.constant 9.99999974E-6 : f32
    %127 = vector.broadcast %cst_24 : f32 to vector<8x1xf32>
    %128 = arith.addf %124, %127 : vector<8x1xf32>
    %129 = math.rsqrt %128 : vector<8x1xf32>
    %130 = vector.broadcast %129 : vector<8x1xf32> to vector<8x32xf32>
    %131 = arith.mulf %126, %130 : vector<8x32xf32>
    %132 = vector.broadcast %4 : vector<1x32xf32> to vector<8x32xf32>
    %133 = arith.mulf %131, %132 : vector<8x32xf32>
    %134 = vector.broadcast %5 : vector<1x32xf32> to vector<8x32xf32>
    %135 = arith.addf %133, %134 : vector<8x32xf32>
    %136 = arith.truncf %135 : vector<8x32xf32> to vector<8x32xbf16>
    %cst_25 = arith.constant dense<0.000000e+00> : vector<8x128xf32>
    %137 = tpu.matmul %136, %10, %cst_25 {dimension_numbers = #tpu.dot_dimension_numbers<[1], [0], [0], [1], [0, 0, 1, 1], [], []>} : vector<8x32xbf16>, vector<32x128xbf16>, vector<8x128xf32> -> vector<8x128xf32>
    %138 = vector.broadcast %9 : vector<1x128xf32> to vector<8x128xf32>
    %139 = arith.addf %137, %138 : vector<8x128xf32>
    %cst_26 = arith.constant 5.000000e-01 : f32
    %140 = vector.broadcast %cst_26 : f32 to vector<8x128xf32>
    %141 = arith.mulf %140, %139 : vector<8x128xf32>
    %cst_27 = arith.constant 4.471500e-02 : f32
    %142 = vector.broadcast %cst_27 : f32 to vector<8x128xf32>
    %143 = arith.mulf %142, %139 : vector<8x128xf32>
    %144 = arith.mulf %143, %139 : vector<8x128xf32>
    %145 = arith.mulf %144, %139 : vector<8x128xf32>
    %146 = arith.addf %139, %145 : vector<8x128xf32>
    %cst_28 = arith.constant 0.797884583 : f32
    %147 = vector.broadcast %cst_28 : f32 to vector<8x128xf32>
    %148 = arith.mulf %147, %146 : vector<8x128xf32>
    %149 = math.tanh %148 : vector<8x128xf32>
    %cst_29 = arith.constant 1.000000e+00 : f32
    %150 = vector.broadcast %cst_29 : f32 to vector<8x128xf32>
    %151 = arith.addf %150, %149 : vector<8x128xf32>
    %152 = arith.mulf %141, %151 : vector<8x128xf32>
    %153 = arith.truncf %152 : vector<8x128xf32> to vector<8x128xbf16>
    %cst_30 = arith.constant dense<0.000000e+00> : vector<8x32xf32>
    %154 = tpu.matmul %153, %13, %cst_30 {dimension_numbers = #tpu.dot_dimension_numbers<[1], [0], [0], [1], [0, 0, 1, 1], [], []>} : vector<8x128xbf16>, vector<128x32xbf16>, vector<8x32xf32> -> vector<8x32xf32>
    %155 = vector.broadcast %7 : vector<1x32xf32> to vector<8x32xf32>
    %156 = arith.addf %154, %155 : vector<8x32xf32>
    %157 = arith.addf %111, %156 : vector<8x32xf32>
    %c0_31 = arith.constant 0 : index
    %c0_32 = arith.constant 0 : index
    %158 = vector.load %arg4[%c0_31, %c0_32] : memref<8x32xf32, #tpu.memory_space<vmem>>, vector<8x32xf32>
    tpu.vector_store %arg4[%c0_31, %c0_32], %157 {strides = array<i32>} : memref<8x32xf32, #tpu.memory_space<vmem>>, vector<8x32xf32>,
    return
  }
  func.func @transform_0(%arg0: i32) -> (i32, i32) {
    %c0_i32 = arith.constant 0 : i32
    %c0_i32_0 = arith.constant 0 : i32
    return %arg0, %c0_i32 : i32, i32
  }
  func.func @transform_1(%arg0: i32) -> (i32, i32) {
    %c0_i32 = arith.constant 0 : i32
    %c0_i32_0 = arith.constant 0 : i32
    %c0_i32_1 = arith.constant 0 : i32
    return %c0_i32, %c0_i32_0 : i32, i32
  }
  func.func @transform_2(%arg0: i32) -> (i32, i32) {
    %c0_i32 = arith.constant 0 : i32
    %c0_i32_0 = arith.constant 0 : i32
    %c0_i32_1 = arith.constant 0 : i32
    return %c0_i32, %c0_i32_0 : i32, i32
  }
  func.func @transform_3(%arg0: i32) -> (i32, i32) {
    %c0_i32 = arith.constant 0 : i32
    %c0_i32_0 = arith.constant 0 : i32
    return %arg0, %c0_i32 : i32, i32
  }
}

</mosaic_0001>

<llo_original>
// kernel: tpu_custom_call.1
$region0: #{tpu_custom_call.1}
  #allocation0 [shape = 'u32[]', space=smem, size = 0x4, offset = 0x4, fixed_abs, tag = 'smem constant byte address 0x4 - core index']
  #allocation1 [shape = 'u32[144,128]{1,0:T(1,128)}', space=vmem, size = 0x12000, scoped, tag = 'internal scratch']
  %s0 = inlined_call_operand.hbm [shape: f32[16,32], index: 0, kind: input, shape index: {}]
  %s1 = inlined_call_operand.hbm [shape: f32[8,128], index: 1, kind: input, shape index: {}]
  %s2 = inlined_call_operand.hbm [shape: bf16[224,128], index: 2, kind: input, shape index: {}]
  %s3 = inlined_call_operand.hbm [shape: f32[16,32], index: 3, kind: output, shape index: {}]
  %s4 = sld [smem:[#allocation0]]
  $region57: #{tpu_custom_call.1} parent=0
    _
  %s6 = ssub.s32 1, %s4
  %s7 = scalar_select 0, %s6, %s4
  $region1: #{tpu_custom_call.1} parent=0
    #allocation2 [shape = 'u8[8192]{0}', space=vmem, size = 0x2000, scoped, tag = 'input window, operand 0']
    #allocation3 [shape = 's32[2]{0}', space=sflag, size = 0x8, scoped, tag = 'scoped memory for tpu_custom_call.1']
    #allocation4 [shape = 's32[2]{0}', space=sflag, size = 0x8, scoped, tag = 'scoped memory for tpu_custom_call.1']
    #allocation5 [shape = 'u8[4096]{0}', space=vmem, size = 0x1000, scoped, tag = 'input window, operand 1, single buffered']
    #allocation6 [shape = 's32[1]{0}', space=sflag, size = 0x4, scoped, tag = 'scoped memory for tpu_custom_call.1']
    #allocation7 [shape = 'u8[57344]{0}', space=vmem, size = 0xe000, scoped, tag = 'input window, operand 2, single buffered']
    #allocation8 [shape = 'u8[8192]{0}', space=vmem, size = 0x2000, scoped, tag = 'output window, operand 0']
    %8 = vsyncpa [#allocation3], 0
    %s9 = scalar_lea.sflag [#allocation3], 1
    %10 = vsyncpa %s9, 0
    %11 = vsyncpa [#allocation6], 0
    %12 = vsyncpa [#allocation4], 0
    %s13 = scalar_lea.sflag [#allocation4], 1
    %14 = vsyncpa %s13, 0
    loop: start=0, step=1, limit=4
    $region2: #{tpu_custom_call.1} parent=1 // loop_pre_header
      _
    $region3: #{tpu_custom_call.1} parent=1 // loop_header
      %s16 = sphi 0, %s20
      %p17 = scmp.ge.s32.totalorder %s16, 4
      %s26 = sphi 0, %s28
      %s29 = sphi 0, %s26
      %s30 = sphi 0, %s29
      %s46 = sphi 0, %s30
      %s50 = sphi 0, %s50
      %s52 = sphi 0, %s50
      %s53 = sphi 0, %s52
      %s67 = sphi 0, %s53
      %s71 = sphi 0, %s71
      %s73 = sphi 0, %s71
      %s74 = sphi 0, %s73
      %s88 = sphi 0, %s74
      %s94 = sphi 0, %s96
      %s97 = sphi 0, %s94
      %s98 = sphi 0, %s97
      %s114 = sphi 0, %s98
    $region4: #{tpu_custom_call.1} parent=1 // loop_header_branch
      %19 = sbr.rel (%p17) target = $region8
    $region5: #{tpu_custom_call.1} parent=1 // loop_body
      %s21 = ssub.s32 %s16, 1
      %s22 = ssub.s32 %s16, 2
      %s23 = sadd.s32 %s16, 1
      %s24 = ssub.s32 %s16, %s23
      %p25 = scmp.eq.s32.totalorder %s24, 0
      %s27 = sadd.s32 %s26, 1
      %s28 = scalar_select %p25, %s26, %s27
      %p31 = pneg %p25
      %p32 = scmp.eq.s32.totalorder %s16, 1
      %p33 = por %p31, %p32
      %p34 = scmp.ne.s32.totalorder %s26, %s29
      %p35 = scmp.eq.s32.totalorder %s16, 0
      %p36 = por %p34, %p35
      %p37 = scmp.ne.s32.totalorder %s26, %s29
      %p38 = scmp.eq.s32.totalorder %s21, 1
      %p39 = por %p37, %p38
      %p40 = scmp.ne.s32.totalorder %s29, %s30
      %p41 = scmp.eq.s32.totalorder %s21, 0
      %p42 = por %p40, %p41
      %p43 = scmp.ne.s32.totalorder %s29, %s30
      %p44 = scmp.eq.s32.totalorder %s22, 1
      %p45 = por %p43, %p44
      %p47 = scmp.ne.s32.totalorder %s30, %s46
      %p48 = scmp.eq.s32.totalorder %s22, 0
      %p49 = por %p47, %p48
      %s51 = sadd.s32 %s50, 1
      %p54 = scmp.eq.s32.totalorder %s16, 1
      %p55 = scmp.ne.s32.totalorder %s50, %s52
      %p56 = scmp.eq.s32.totalorder %s16, 0
      %p57 = por %p55, %p56
      %p58 = scmp.ne.s32.totalorder %s50, %s52
      %p59 = scmp.eq.s32.totalorder %s21, 1
      %p60 = por %p58, %p59
      %p61 = scmp.ne.s32.totalorder %s52, %s53
      %p62 = scmp.eq.s32.totalorder %s21, 0
      %p63 = por %p61, %p62
      %p64 = scmp.ne.s32.totalorder %s52, %s53
      %p65 = scmp.eq.s32.totalorder %s22, 1
      %p66 = por %p64, %p65
      %p68 = scmp.ne.s32.totalorder %s53, %s67
      %p69 = scmp.eq.s32.totalorder %s22, 0
      %p70 = por %p68, %p69
      %s72 = sadd.s32 %s71, 1
      %p75 = scmp.eq.s32.totalorder %s16, 1
      %p76 = scmp.ne.s32.totalorder %s71, %s73
      %p77 = scmp.eq.s32.totalorder %s16, 0
      %p78 = por %p76, %p77
      %p79 = scmp.ne.s32.totalorder %s71, %s73
      %p80 = scmp.eq.s32.totalorder %s21, 1
      %p81 = por %p79, %p80
      %p82 = scmp.ne.s32.totalorder %s73, %s74
      %p83 = scmp.eq.s32.totalorder %s21, 0
      %p84 = por %p82, %p83
      %p85 = scmp.ne.s32.totalorder %s73, %s74
      %p86 = scmp.eq.s32.totalorder %s22, 1
      %p87 = por %p85, %p86
      %p89 = scmp.ne.s32.totalorder %s74, %s88
      %p90 = scmp.eq.s32.totalorder %s22, 0
      %p91 = por %p89, %p90
      %s92 = ssub.s32 %s16, %s23
      %p93 = scmp.eq.s32.totalorder %s92, 0
      %s95 = sadd.s32 %s94, 1
      %s96 = scalar_select %p93, %s94, %s95
      %p99 = pneg %p93
      %p100 = scmp.eq.s32.totalorder %s16, 1
      %p101 = por %p99, %p100
      %p102 = scmp.ne.s32.totalorder %s94, %s97
      %p103 = scmp.eq.s32.totalorder %s16, 0
      %p104 = por %p102, %p103
      %p105 = scmp.ne.s32.totalorder %s94, %s97
      %p106 = scmp.eq.s32.totalorder %s21, 1
      %p107 = por %p105, %p106
      %p108 = scmp.ne.s32.totalorder %s97, %s98
      %p109 = scmp.eq.s32.totalorder %s21, 0
      %p110 = por %p108, %p109
      %p111 = scmp.ne.s32.totalorder %s97, %s98
      %p112 = scmp.eq.s32.totalorder %s22, 1
      %p113 = por %p111, %p112
      %p115 = scmp.ne.s32.totalorder %s98, %s114
      %p116 = scmp.eq.s32.totalorder %s22, 0
      %p117 = por %p115, %p116
      %p118 = scmp.le.s32.totalorder 1, %s16
      %p119 = scmp.lt.s32.totalorder %s16, 3
      %p120 = pnand %p118, %p119
      %p121 = pneg %p120
      // Predicated region
      $region9: #{tpu_custom_call.1} parent=5 // pred_check
        _
      $region10: #{tpu_custom_call.1} parent=5 // pred_check_branch
        %123 = sbr.rel (%p120) target = $region12
      $region11: #{tpu_custom_call.1} parent=5 // pred_region
        %s124 = ssub.s32 %s16, 1
        // Predicated region
        $region13: #{tpu_custom_call.1} parent=11 // pred_check
          %p125 = pneg %p63
        $region14: #{tpu_custom_call.1} parent=11 // pred_check_branch
          %127 = sbr.rel (%p125) target = $region16
        $region15: #{tpu_custom_call.1} parent=11 // pred_region
          %s129 = ssub.s32 128, 128
          %130 = vsyncadd [#allocation6], %s129
          %s132 = sshll.u32 [#allocation5], 4
          %s133 = int_to_ptr.vmem [resolvable:$true] %s132
          %135 = dma.hbm_to_vmem [thread:$0]  %s1, 128, %s133, [#allocation6]
        $region16: #{tpu_custom_call.1} parent=11 // pred_fallthru
          _
        // Predicated region
        $region17: #{tpu_custom_call.1} parent=11 // pred_check
          %p136 = pneg %p84
        $region18: #{tpu_custom_call.1} parent=11 // pred_check_branch
          %138 = sbr.rel (%p136) target = $region20
        $region19: #{tpu_custom_call.1} parent=11 // pred_region
          %s140 = ssub.s32 1792, 1792
          %141 = vsyncadd [#allocation6], %s140
          %s142 = sshll.u32 [#allocation7], 4
          %s143 = int_to_ptr.vmem [resolvable:$true] %s142
          %148 = dma.hbm_to_vmem [thread:$0]  %s2, 1792, %s143, [#allocation6], 64, 64, 4
        $region20: #{tpu_custom_call.1} parent=11 // pred_fallthru
          _
      $region12: #{tpu_custom_call.1} parent=5 // pred_fallthru
        _
      %p149 = scmp.lt.s32.totalorder %s16, 2
      // Predicated region
      $region21: #{tpu_custom_call.1} parent=5 // pred_check
        %p150 = pneg %p149
      $region22: #{tpu_custom_call.1} parent=5 // pred_check_branch
        %152 = sbr.rel (%p150) target = $region24
      $region23: #{tpu_custom_call.1} parent=5 // pred_region
        // Predicated region
        $region25: #{tpu_custom_call.1} parent=23 // pred_check
          %p153 = pneg %p36
        $region26: #{tpu_custom_call.1} parent=23 // pred_check_branch
          %155 = sbr.rel (%p153) target = $region28
        $region27: #{tpu_custom_call.1} parent=23 // pred_region
          %s156 = sand.u32 %s26, 1
          %s157 = scalar_lea.sflag [#allocation3], %s156
          %s158 = sand.u32 %s26, 1
          %s159 = smul.addr %s158, 8
          %s160 = scalar_lea.vmem [#allocation2], %s159
          %s162 = ssub.s32 128, 128
          %163 = vsyncadd %s157, %s162
          %s164 = smul.addr %s16, 128
          %s165 = scalar_lea.hbm %s0, %s164
          %s167 = sshll.u32 %s160, 4
          %s168 = int_to_ptr.vmem [resolvable:$true] %s167
          %170 = dma.hbm_to_vmem [thread:$0]  %s165, 128, %s168, %s157
        $region28: #{tpu_custom_call.1} parent=23 // pred_fallthru
          _
      $region24: #{tpu_custom_call.1} parent=5 // pred_fallthru
        _
      %p171 = scmp.le.s32.totalorder 1, %s16
      %p172 = scmp.lt.s32.totalorder %s16, 3
      %p173 = pnand %p171, %p172
      %p174 = pneg %p173
      // Predicated region
      $region29: #{tpu_custom_call.1} parent=5 // pred_check
        _
      $region30: #{tpu_custom_call.1} parent=5 // pred_check_branch
        %176 = sbr.rel (%p173) target = $region32
      $region31: #{tpu_custom_call.1} parent=5 // pred_region
        %s177 = ssub.s32 %s16, 1
        %s178 = sand.u32 %s29, 1
        %s179 = scalar_lea.sflag [#allocation3], %s178
        %s180 = sand.u32 %s29, 1
        %s181 = smul.addr %s180, 8
        %s182 = scalar_lea.vmem [#allocation2], %s181
        // Predicated region
        $region33: #{tpu_custom_call.1} parent=31 // pred_check
          %p183 = pneg %p42
        $region34: #{tpu_custom_call.1} parent=31 // pred_check_branch
          %185 = sbr.rel (%p183) target = $region36
        $region35: #{tpu_custom_call.1} parent=31 // pred_region
          %186 = dma.done %s179, 128
        $region36: #{tpu_custom_call.1} parent=31 // pred_fallthru
          _
        // Predicated region
        $region37: #{tpu_custom_call.1} parent=31 // pred_check
          %p187 = pneg %p63
        $region38: #{tpu_custom_call.1} parent=31 // pred_check_branch
          %189 = sbr.rel (%p187) target = $region40
        $region39: #{tpu_custom_call.1} parent=31 // pred_region
          %190 = dma.done [#allocation6], 128
        $region40: #{tpu_custom_call.1} parent=31 // pred_fallthru
          _
        // Predicated region
        $region41: #{tpu_custom_call.1} parent=31 // pred_check
          %p191 = pneg %p84
        $region42: #{tpu_custom_call.1} parent=31 // pred_check_branch
          %193 = sbr.rel (%p191) target = $region44
        $region43: #{tpu_custom_call.1} parent=31 // pred_region
          %194 = dma.done [#allocation6], 1792
        $region44: #{tpu_custom_call.1} parent=31 // pred_fallthru
          _
        %s195 = sand.u32 %s29, 1
        %s196 = scalar_lea.sflag [#allocation3], %s195
        %s197 = sand.u32 %s29, 1
        %s198 = smul.addr %s197, 8
        %s199 = scalar_lea.vmem [#allocation2], %s198
        %p200 = pneg %p42
        %p201 = pneg %p39
        %p202 = pneg %p63
        %p203 = pneg %p60
        %p204 = pneg %p84
        %p205 = pneg %p81
        %p206 = pneg %p110
        %p207 = pneg %p107
        %s208 = sand.u32 %s97, 1
        %s209 = scalar_lea.sflag [#allocation4], %s208
        %s210 = sand.u32 %s97, 1
        %s211 = smul.addr %s210, 8
        %s212 = scalar_lea.vmem [#allocation8], %s211
        %v214 = vld [vmem:[%s182] sm:$0xff]
        %v215 = vld [vmem:[#allocation5] sm:$0xff]
        %v216 = vld [vmem:[#allocation7] sm:$0xf]
        %v217 = vld [vmem:[#allocation7 + $0x4] sm:$0xf]
        %v218 = vld [vmem:[#allocation7 + $0x8] sm:$0xf]
        %v219 = vld [vmem:[#allocation7 + $0xc] sm:$0xf]
        %v220 = vld [vmem:[#allocation7 + $0x10] sm:$0xf]
        %v221 = vld [vmem:[#allocation7 + $0x14] sm:$0xf]
        %v222 = vld [vmem:[#allocation7 + $0x18] sm:$0xf]
        %v223 = vld [vmem:[#allocation7 + $0x1c] sm:$0xf]
        %v224 = vld [vmem:[#allocation7 + $0x20] sm:$0xf]
        %v225 = vld [vmem:[#allocation7 + $0x24] sm:$0xf]
        %v226 = vld [vmem:[#allocation7 + $0x28] sm:$0xf]
        %v227 = vld [vmem:[#allocation7 + $0x2c] sm:$0xf]
        %v228 = vld [vmem:[#allocation7 + $0x30] sm:$0xf]
        %v229 = vld [vmem:[#allocation7 + $0x34] sm:$0xf]
        %v230 = vld [vmem:[#allocation7 + $0x38] sm:$0xf]
        %v231 = vld [vmem:[#allocation7 + $0x3c] sm:$0xf]
        %v232 = vld [vmem:[#allocation7 + $0x40] sm:$0xf]
        %v233 = vld [vmem:[#allocation7 + $0x44] sm:$0xf]
        %v234 = vld [vmem:[#allocation7 + $0x48] sm:$0xf]
        %v235 = vld [vmem:[#allocation7 + $0x4c] sm:$0xf]
        %v236 = vld [vmem:[#allocation7 + $0x50] sm:$0xf]
        %v237 = vld [vmem:[#allocation7 + $0x54] sm:$0xf]
        %v238 = vld [vmem:[#allocation7 + $0x58] sm:$0xf]
        %v239 = vld [vmem:[#allocation7 + $0x5c] sm:$0xf]
        %v240 = vld [vmem:[#allocation7 + $0x60] sm:$0xf]
        %v241 = vld [vmem:[#allocation7 + $0x64] sm:$0xf]
        %v242 = vld [vmem:[#allocation7 + $0x68] sm:$0xf]
        %v243 = vld [vmem:[#allocation7 + $0x6c] sm:$0xf]
        %vm244 = vcmask 261120
        %v245 = vsel %vm244, %v214, 0.0
        %246 = vadd.xlane.f32.xlu0 %v245
        %v247 = vpop.xlane.xlu0 %246
        %v248 = vrcp.pop 32.0
        %v249 = vmul.f32 %v247, %v248
        %v250 = vsub.f32 %v214, %v249
        %v251 = vmul.f32 %v250, %v250
        %v252 = vsel %vm244, %v251, 0.0
        %253 = vadd.xlane.f32.xlu0 %v252
        %v254 = vpop.xlane.xlu0 %253
        %v255 = vmul.f32 %v254, %v248
        %v256 = vadd.f32 %v255, 1e-05
        %v257 = vrsqrt.pop %v256
        %v258 = vmul.f32 %v250, %v257
        %v259 = vlaneseq
        %v260 = vshrl.u32 %v259, 7
        %v261 = vsub.s32 0, %v260
        %v262 = vrot.slane %v215, %v261
        %v263 = vmul.f32 %v258, %v262
        %v264 = vlaneseq
        %v265 = vshrl.u32 %v264, 7
        %v266 = vsub.s32 1, %v265
        %v267 = vrot.slane %v215, %v266
        %v268 = vadd.f32 %v263, %v267
        %v269 = vpack.c.bf16 %v268, %v268
        %v270 = vlaneseq
        %v271 = vshrl.u32 %v270, 7
        %v272 = vsub.s32 6, %v271
        %v273 = vrot.slane %v215, %v272
        %v278 = vunpack.c.l.b16 %v220
        %v279 = vunpack.c.l.b16 %v221
        %v280 = vunpack.c.l.b16 %v222
        %v281 = vunpack.c.l.b16 %v223
        %v282 = vpack.c.b16 %v279, %v278
        %v283 = vpack.c.b16 %v281, %v280
        %v287 = vsel %vm244, %v269, 0
        %289 = vmatprep.subr.bf16.mxu0 0
        %290 = vmatpush1.bf16.msra.mxu0 %v282
        %291 = vmatprep.subr.bf16.mxu0 0
        %292 = vmatpush1.bf16.msra.mxu0 %v283
        %293 = vmatprep.subr.bf16.mxu0 0
        %294 = vmatpush1.bf16.msra.mxu0 0
        %295 = vmatprep.subr.bf16.mxu0 0
        %296 = vmatpush1.bf16.msra.mxu0 0
        %297 = vmatprep.subr.bf16.mxu0 0
        %298 = vmatpush1.bf16.msra.mxu0 0
        %299 = vmatprep.subr.bf16.mxu0 0
        %300 = vmatpush1.bf16.msra.mxu0 0
        %301 = vmatprep.subr.bf16.mxu0 0
        %302 = vmatpush1.bf16.msra.mxu0 0
        %303 = vmatprep.subr.bf16.mxu0 0
        %304 = vmatpush1.bf16.msra.mxu0 0
        %305 = vmatprep.subr.bf16.mxu0 0
        %306 = vmatpush1.bf16.msra.mxu0 0
        %307 = vmatprep.subr.bf16.mxu0 0
        %308 = vmatpush1.bf16.msra.mxu0 0
        %309 = vmatprep.subr.bf16.mxu0 0
        %310 = vmatpush1.bf16.msra.mxu0 0
        %311 = vmatprep.subr.bf16.mxu0 0
        %312 = vmatpush1.bf16.msra.mxu0 0
        %313 = vmatprep.subr.bf16.mxu0 0
        %314 = vmatpush1.bf16.msra.mxu0 0
        %315 = vmatprep.subr.bf16.mxu0 0
        %316 = vmatpush1.bf16.msra.mxu0 0
        %317 = vmatprep.subr.bf16.mxu0 0
        %318 = vmatpush1.bf16.msra.mxu0 0
        %319 = vmatprep.subr.bf16.mxu0 0
        %320 = vmatpush1.bf16.msra.mxu0 0
        %321 = vmatprep.mubr.bf16.mxu0 0
        %322 = vmatmul.mubr.bf16.gmra.mrb[0].mxu0 %v287
        %v323 = vpop.f32.mrb[0].mxu0
        %v324 = vadd.f32 %v273, %v323
        %v325 = vpop.f32.mrb[0].mxu0
        %v326 = vpop.f32.mrb[0].mxu0
        %v327 = vpop.f32.mrb[0].mxu0
        %328 = vdwg.mxu0
        %v329 = vmul.f32 %v324, 0.35355338
        %331 = vrot.lane.b32.xlu0 %v329, 120
        %v332 = vpop.permute.xlu0 %331
        %334 = vrot.lane.b32.xlu0 %v329, 112
        %v335 = vpop.permute.xlu0 %334
        %337 = vrot.lane.b32.xlu0 %v329, 104
        %v338 = vpop.permute.xlu0 %337
        %v340 = vpack.c.bf16 %v329, %v329
        %v341 = vpack.c.bf16 %v332, %v332
        %v342 = vpack.c.bf16 %v335, %v335
        %v343 = vpack.c.bf16 %v338, %v338
        %345 = vrot.lane.b32.xlu0 %v324, 120
        %v346 = vpop.permute.xlu0 %345
        %348 = vrot.lane.b32.xlu0 %v324, 112
        %v349 = vpop.permute.xlu0 %348
        %351 = vrot.lane.b32.xlu0 %v324, 104
        %v352 = vpop.permute.xlu0 %351
        %v354 = vpack.c.bf16 %v324, %v324
        %v355 = vpack.c.bf16 %v346, %v346
        %v356 = vpack.c.bf16 %v349, %v349
        %v357 = vpack.c.bf16 %v352, %v352
        %359 = vrot.lane.b32.xlu0 %v354, 96
        %v360 = vpop.permute.xlu0 %359
        %vm361 = vcmask 64512
        %v363 = vsel %vm361, %v340, 0
        %v366 = vsel %vm361, %v360, 0
        %368 = vmatprep.subr.bf16.mxu0 0
        %369 = vmatpush1.bf16.xpose.msra.mxu0 %v366
        %370 = vmatprep.subr.bf16.mxu0 0
        %371 = vmatpush1.bf16.xpose.msra.mxu0 0
        %372 = vmatprep.subr.bf16.mxu0 0
        %373 = vmatpush1.bf16.xpose.msra.mxu0 0
        %374 = vmatprep.subr.bf16.mxu0 0
        %375 = vmatpush1.bf16.xpose.msra.mxu0 0
        %376 = vmatprep.subr.bf16.mxu0 0
        %377 = vmatpush1.bf16.xpose.msra.mxu0 0
        %378 = vmatprep.subr.bf16.mxu0 0
        %379 = vmatpush1.bf16.xpose.msra.mxu0 0
        %380 = vmatprep.subr.bf16.mxu0 0
        %381 = vmatpush1.bf16.xpose.msra.mxu0 0
        %382 = vmatprep.subr.bf16.mxu0 0
        %383 = vmatpush1.bf16.xpose.msra.mxu0 0
        %384 = vmatprep.subr.bf16.mxu0 0
        %385 = vmatpush1.bf16.xpose.msra.mxu0 0
        %386 = vmatprep.subr.bf16.mxu0 0
        %387 = vmatpush1.bf16.xpose.msra.mxu0 0
        %388 = vmatprep.subr.bf16.mxu0 0
        %389 = vmatpush1.bf16.xpose.msra.mxu0 0
        %390 = vmatprep.subr.bf16.mxu0 0
        %391 = vmatpush1.bf16.xpose.msra.mxu0 0
        %392 = vmatprep.subr.bf16.mxu0 0
        %393 = vmatpush1.bf16.xpose.msra.mxu0 0
        %394 = vmatprep.subr.bf16.mxu0 0
        %395 = vmatpush1.bf16.xpose.msra.mxu0 0
        %396 = vmatprep.subr.bf16.mxu0 0
        %397 = vmatpush1.bf16.xpose.msra.mxu0 0
        %398 = vmatprep.subr.bf16.mxu0 0
        %399 = vmatpush1.bf16.xpose.msra.mxu0 0
        %400 = vmatprep.mubr.bf16.mxu0 0
        %401 = vmatmul.mubr.bf16.gmra.mrb[0].mxu0 %v363
        %v402 = vpop.f32.mrb[0].mxu0
        %v403 = vadd.f32 0.0, %v402
        %v404 = vpop.f32.mrb[0].mxu0
        %v405 = vpop.f32.mrb[0].mxu0
        %v406 = vpop.f32.mrb[0].mxu0
        %407 = vdwg.mxu0
        %409 = vrot.lane.b32.xlu0 %v355, 96
        %v410 = vpop.permute.xlu0 %409
        %v412 = vsel %vm361, %v341, 0
        %v415 = vsel %vm361, %v410, 0
        %417 = vmatprep.subr.bf16.mxu0 0
        %418 = vmatpush1.bf16.xpose.msra.mxu0 %v415
        %419 = vmatprep.subr.bf16.mxu0 0
        %420 = vmatpush1.bf16.xpose.msra.mxu0 0
        %421 = vmatprep.subr.bf16.mxu0 0
        %422 = vmatpush1.bf16.xpose.msra.mxu0 0
        %423 = vmatprep.subr.bf16.mxu0 0
        %424 = vmatpush1.bf16.xpose.msra.mxu0 0
        %425 = vmatprep.subr.bf16.mxu0 0
        %426 = vmatpush1.bf16.xpose.msra.mxu0 0
        %427 = vmatprep.subr.bf16.mxu0 0
        %428 = vmatpush1.bf16.xpose.msra.mxu0 0
        %429 = vmatprep.subr.bf16.mxu0 0
        %430 = vmatpush1.bf16.xpose.msra.mxu0 0
        %431 = vmatprep.subr.bf16.mxu0 0
        %432 = vmatpush1.bf16.xpose.msra.mxu0 0
        %433 = vmatprep.subr.bf16.mxu0 0
        %434 = vmatpush1.bf16.xpose.msra.mxu0 0
        %435 = vmatprep.subr.bf16.mxu0 0
        %436 = vmatpush1.bf16.xpose.msra.mxu0 0
        %437 = vmatprep.subr.bf16.mxu0 0
        %438 = vmatpush1.bf16.xpose.msra.mxu0 0
        %439 = vmatprep.subr.bf16.mxu0 0
        %440 = vmatpush1.bf16.xpose.msra.mxu0 0
        %441 = vmatprep.subr.bf16.mxu0 0
        %442 = vmatpush1.bf16.xpose.msra.mxu0 0
        %443 = vmatprep.subr.bf16.mxu0 0
        %444 = vmatpush1.bf16.xpose.msra.mxu0 0
        %445 = vmatprep.subr.bf16.mxu0 0
        %446 = vmatpush1.bf16.xpose.msra.mxu0 0
        %447 = vmatprep.subr.bf16.mxu0 0
        %448 = vmatpush1.bf16.xpose.msra.mxu0 0
        %449 = vmatprep.mubr.bf16.mxu0 0
        %450 = vmatmul.mubr.bf16.gmra.mrb[0].mxu0 %v412
        %v451 = vpop.f32.mrb[0].mxu0
        %v452 = vadd.f32 0.0, %v451
        %v453 = vpop.f32.mrb[0].mxu0
        %v454 = vpop.f32.mrb[0].mxu0
        %v455 = vpop.f32.mrb[0].mxu0
        %456 = vdwg.mxu0
        %458 = vrot.lane.b32.xlu0 %v356, 96
        %v459 = vpop.permute.xlu0 %458
        %v461 = vsel %vm361, %v342, 0
        %v464 = vsel %vm361, %v459, 0
        %466 = vmatprep.subr.bf16.mxu0 0
        %467 = vmatpush1.bf16.xpose.msra.mxu0 %v464
        %468 = vmatprep.subr.bf16.mxu0 0
        %469 = vmatpush1.bf16.xpose.msra.mxu0 0
        %470 = vmatprep.subr.bf16.mxu0 0
        %471 = vmatpush1.bf16.xpose.msra.mxu0 0
        %472 = vmatprep.subr.bf16.mxu0 0
        %473 = vmatpush1.bf16.xpose.msra.mxu0 0
        %474 = vmatprep.subr.bf16.mxu0 0
        %475 = vmatpush1.bf16.xpose.msra.mxu0 0
        %476 = vmatprep.subr.bf16.mxu0 0
        %477 = vmatpush1.bf16.xpose.msra.mxu0 0
        %478 = vmatprep.subr.bf16.mxu0 0
        %479 = vmatpush1.bf16.xpose.msra.mxu0 0
        %480 = vmatprep.subr.bf16.mxu0 0
        %481 = vmatpush1.bf16.xpose.msra.mxu0 0
        %482 = vmatprep.subr.bf16.mxu0 0
        %483 = vmatpush1.bf16.xpose.msra.mxu0 0
        %484 = vmatprep.subr.bf16.mxu0 0
        %485 = vmatpush1.bf16.xpose.msra.mxu0 0
        %486 = vmatprep.subr.bf16.mxu0 0
        %487 = vmatpush1.bf16.xpose.msra.mxu0 0
        %488 = vmatprep.subr.bf16.mxu0 0
        %489 = vmatpush1.bf16.xpose.msra.mxu0 0
        %490 = vmatprep.subr.bf16.mxu0 0
        %491 = vmatpush1.bf16.xpose.msra.mxu0 0
        %492 = vmatprep.subr.bf16.mxu0 0
        %493 = vmatpush1.bf16.xpose.msra.mxu0 0
        %494 = vmatprep.subr.bf16.mxu0 0
        %495 = vmatpush1.bf16.xpose.msra.mxu0 0
        %496 = vmatprep.subr.bf16.mxu0 0
        %497 = vmatpush1.bf16.xpose.msra.mxu0 0
        %498 = vmatprep.mubr.bf16.mxu0 0
        %499 = vmatmul.mubr.bf16.gmra.mrb[0].mxu0 %v461
        %v500 = vpop.f32.mrb[0].mxu0
        %v501 = vadd.f32 0.0, %v500
        %v502 = vpop.f32.mrb[0].mxu0
        %v503 = vpop.f32.mrb[0].mxu0
        %v504 = vpop.f32.mrb[0].mxu0
        %505 = vdwg.mxu0
        %507 = vrot.lane.b32.xlu0 %v357, 96
        %v508 = vpop.permute.xlu0 %507
        %v510 = vsel %vm361, %v343, 0
        %v513 = vsel %vm361, %v508, 0
        %515 = vmatprep.subr.bf16.mxu0 0
        %516 = vmatpush1.bf16.xpose.msra.mxu0 %v513
        %517 = vmatprep.subr.bf16.mxu0 0
        %518 = vmatpush1.bf16.xpose.msra.mxu0 0
        %519 = vmatprep.subr.bf16.mxu0 0
        %520 = vmatpush1.bf16.xpose.msra.mxu0 0
        %521 = vmatprep.subr.bf16.mxu0 0
        %522 = vmatpush1.bf16.xpose.msra.mxu0 0
        %523 = vmatprep.subr.bf16.mxu0 0
        %524 = vmatpush1.bf16.xpose.msra.mxu0 0
        %525 = vmatprep.subr.bf16.mxu0 0
        %526 = vmatpush1.bf16.xpose.msra.mxu0 0
        %527 = vmatprep.subr.bf16.mxu0 0
        %528 = vmatpush1.bf16.xpose.msra.mxu0 0
        %529 = vmatprep.subr.bf16.mxu0 0
        %530 = vmatpush1.bf16.xpose.msra.mxu0 0
        %531 = vmatprep.subr.bf16.mxu0 0
        %532 = vmatpush1.bf16.xpose.msra.mxu0 0
        %533 = vmatprep.subr.bf16.mxu0 0
        %534 = vmatpush1.bf16.xpose.msra.mxu0 0
        %535 = vmatprep.subr.bf16.mxu0 0
        %536 = vmatpush1.bf16.xpose.msra.mxu0 0
        %537 = vmatprep.subr.bf16.mxu0 0
        %538 = vmatpush1.bf16.xpose.msra.mxu0 0
        %539 = vmatprep.subr.bf16.mxu0 0
        %540 = vmatpush1.bf16.xpose.msra.mxu0 0
        %541 = vmatprep.subr.bf16.mxu0 0
        %542 = vmatpush1.bf16.xpose.msra.mxu0 0
        %543 = vmatprep.subr.bf16.mxu0 0
        %544 = vmatpush1.bf16.xpose.msra.mxu0 0
        %545 = vmatprep.subr.bf16.mxu0 0
        %546 = vmatpush1.bf16.xpose.msra.mxu0 0
        %547 = vmatprep.mubr.bf16.mxu0 0
        %548 = vmatmul.mubr.bf16.gmra.mrb[0].mxu0 %v510
        %v549 = vpop.f32.mrb[0].mxu0
        %v550 = vadd.f32 0.0, %v549
        %v551 = vpop.f32.mrb[0].mxu0
        %v552 = vpop.f32.mrb[0].mxu0
        %v553 = vpop.f32.mrb[0].mxu0
        %554 = vdwg.mxu0
        %v555 = vlaneseq
        %v556 = vshrl.u32 %v555, 7
        %v557 = vlaneseq
        %v558 = vand.u32 %v557, 127
        %vm559 = vcmp.ge.s32.totalorder %v556, %v558
        %v560 = vsel %vm559, 1, 0
        %vm561 = vcmp.eq.s32.totalorder %v560, 1
        %v562 = vsel %vm561, %v403, -1e+30
        %v563 = vsel %vm561, %v452, -1e+30
        %v564 = vsel %vm561, %v501, -1e+30
        %v565 = vsel %vm561, %v550, -1e+30
        %v566 = vsel %vm361, %v562, -inf
        %567 = vmax.xlane.f32.xlu0 %v566
        %v568 = vpop.xlane.xlu0 %567
        %v569 = vsel %vm361, %v563, -inf
        %570 = vmax.xlane.f32.xlu0 %v569
        %v571 = vpop.xlane.xlu0 %570
        %v572 = vsel %vm361, %v564, -inf
        %573 = vmax.xlane.f32.xlu0 %v572
        %v574 = vpop.xlane.xlu0 %573
        %v575 = vsel %vm361, %v565, -inf
        %576 = vmax.xlane.f32.xlu0 %v575
        %v577 = vpop.xlane.xlu0 %576
        %v578 = vsub.f32 %v562, %v568
        %v579 = vsub.f32 %v563, %v571
        %v580 = vsub.f32 %v564, %v574
        %v581 = vsub.f32 %v565, %v577
        %v582 = vmul.f32 %v578, 1.442695
        %v583 = vpow.pop %v582
        %v584 = vmul.f32 %v579, 1.442695
        %v585 = vpow.pop %v584
        %v586 = vmul.f32 %v580, 1.442695
        %v587 = vpow.pop %v586
        %v588 = vmul.f32 %v581, 1.442695
        %v589 = vpow.pop %v588
        %v590 = vsel %vm361, %v583, 0.0
        %591 = vadd.xlane.f32.xlu0 %v590
        %v592 = vpop.xlane.xlu0 %591
        %v593 = vsel %vm361, %v585, 0.0
        %594 = vadd.xlane.f32.xlu0 %v593
        %v595 = vpop.xlane.xlu0 %594
        %v596 = vsel %vm361, %v587, 0.0
        %597 = vadd.xlane.f32.xlu0 %v596
        %v598 = vpop.xlane.xlu0 %597
        %v599 = vsel %vm361, %v589, 0.0
        %600 = vadd.xlane.f32.xlu0 %v599
        %v601 = vpop.xlane.xlu0 %600
        %v602 = vrcp.pop %v592
        %v603 = vrcp.pop %v595
        %v604 = vrcp.pop %v598
        %v605 = vrcp.pop %v601
        %v606 = vmul.f32 %v583, %v602
        %v607 = vmul.f32 %v585, %v603
        %v608 = vmul.f32 %v587, %v604
        %v609 = vmul.f32 %v589, %v605
        %v610 = vpack.c.bf16 %v606, %v606
        %v611 = vpack.c.bf16 %v607, %v607
        %v612 = vpack.c.bf16 %v608, %v608
        %v613 = vpack.c.bf16 %v609, %v609
        %614 = vrot.lane.b32.xlu0 %v354, 64
        %v615 = vpop.permute.xlu0 %614
        %v617 = vsel %vm361, %v610, 0
        %vm619 = vcmask 1043456
        %v621 = vsel %vm619, %v615, 0
        %623 = vmatprep.subr.bf16.mxu0 0
        %624 = vmatpush1.bf16.msra.mxu0 %v621
        %625 = vmatprep.subr.bf16.mxu0 0
        %626 = vmatpush1.bf16.msra.mxu0 0
        %627 = vmatprep.subr.bf16.mxu0 0
        %628 = vmatpush1.bf16.msra.mxu0 0
        %629 = vmatprep.subr.bf16.mxu0 0
        %630 = vmatpush1.bf16.msra.mxu0 0
        %631 = vmatprep.subr.bf16.mxu0 0
        %632 = vmatpush1.bf16.msra.mxu0 0
        %633 = vmatprep.subr.bf16.mxu0 0
        %634 = vmatpush1.bf16.msra.mxu0 0
        %635 = vmatprep.subr.bf16.mxu0 0
        %636 = vmatpush1.bf16.msra.mxu0 0
        %637 = vmatprep.subr.bf16.mxu0 0
        %638 = vmatpush1.bf16.msra.mxu0 0
        %639 = vmatprep.subr.bf16.mxu0 0
        %640 = vmatpush1.bf16.msra.mxu0 0
        %641 = vmatprep.subr.bf16.mxu0 0
        %642 = vmatpush1.bf16.msra.mxu0 0
        %643 = vmatprep.subr.bf16.mxu0 0
        %644 = vmatpush1.bf16.msra.mxu0 0
        %645 = vmatprep.subr.bf16.mxu0 0
        %646 = vmatpush1.bf16.msra.mxu0 0
        %647 = vmatprep.subr.bf16.mxu0 0
        %648 = vmatpush1.bf16.msra.mxu0 0
        %649 = vmatprep.subr.bf16.mxu0 0
        %650 = vmatpush1.bf16.msra.mxu0 0
        %651 = vmatprep.subr.bf16.mxu0 0
        %652 = vmatpush1.bf16.msra.mxu0 0
        %653 = vmatprep.subr.bf16.mxu0 0
        %654 = vmatpush1.bf16.msra.mxu0 0
        %655 = vmatprep.mubr.bf16.mxu0 0
        %656 = vmatmul.mubr.bf16.gmra.mrb[0].mxu0 %v617
        %v657 = vpop.f32.mrb[0].mxu0
        %v658 = vadd.f32 0.0, %v657
        %v659 = vpop.f32.mrb[0].mxu0
        %v660 = vpop.f32.mrb[0].mxu0
        %v661 = vpop.f32.mrb[0].mxu0
        %662 = vdwg.mxu0
        %663 = vrot.lane.b32.xlu0 %v355, 64
        %v664 = vpop.permute.xlu0 %663
        %v666 = vsel %vm361, %v611, 0
        %v669 = vsel %vm619, %v664, 0
        %671 = vmatprep.subr.bf16.mxu0 0
        %672 = vmatpush1.bf16.msra.mxu0 %v669
        %673 = vmatprep.subr.bf16.mxu0 0
        %674 = vmatpush1.bf16.msra.mxu0 0
        %675 = vmatprep.subr.bf16.mxu0 0
        %676 = vmatpush1.bf16.msra.mxu0 0
        %677 = vmatprep.subr.bf16.mxu0 0
        %678 = vmatpush1.bf16.msra.mxu0 0
        %679 = vmatprep.subr.bf16.mxu0 0
        %680 = vmatpush1.bf16.msra.mxu0 0
        %681 = vmatprep.subr.bf16.mxu0 0
        %682 = vmatpush1.bf16.msra.mxu0 0
        %683 = vmatprep.subr.bf16.mxu0 0
        %684 = vmatpush1.bf16.msra.mxu0 0
        %685 = vmatprep.subr.bf16.mxu0 0
        %686 = vmatpush1.bf16.msra.mxu0 0
        %687 = vmatprep.subr.bf16.mxu0 0
        %688 = vmatpush1.bf16.msra.mxu0 0
        %689 = vmatprep.subr.bf16.mxu0 0
        %690 = vmatpush1.bf16.msra.mxu0 0
        %691 = vmatprep.subr.bf16.mxu0 0
        %692 = vmatpush1.bf16.msra.mxu0 0
        %693 = vmatprep.subr.bf16.mxu0 0
        %694 = vmatpush1.bf16.msra.mxu0 0
        %695 = vmatprep.subr.bf16.mxu0 0
        %696 = vmatpush1.bf16.msra.mxu0 0
        %697 = vmatprep.subr.bf16.mxu0 0
        %698 = vmatpush1.bf16.msra.mxu0 0
        %699 = vmatprep.subr.bf16.mxu0 0
        %700 = vmatpush1.bf16.msra.mxu0 0
        %701 = vmatprep.subr.bf16.mxu0 0
        %702 = vmatpush1.bf16.msra.mxu0 0
        %703 = vmatprep.mubr.bf16.mxu0 0
        %704 = vmatmul.mubr.bf16.gmra.mrb[0].mxu0 %v666
        %v705 = vpop.f32.mrb[0].mxu0
        %v706 = vadd.f32 0.0, %v705
        %v707 = vpop.f32.mrb[0].mxu0
        %v708 = vpop.f32.mrb[0].mxu0
        %v709 = vpop.f32.mrb[0].mxu0
        %710 = vdwg.mxu0
        %711 = vrot.lane.b32.xlu0 %v356, 64
        %v712 = vpop.permute.xlu0 %711
        %v714 = vsel %vm361, %v612, 0
        %v717 = vsel %vm619, %v712, 0
        %719 = vmatprep.subr.bf16.mxu0 0
        %720 = vmatpush1.bf16.msra.mxu0 %v717
        %721 = vmatprep.subr.bf16.mxu0 0
        %722 = vmatpush1.bf16.msra.mxu0 0
        %723 = vmatprep.subr.bf16.mxu0 0
        %724 = vmatpush1.bf16.msra.mxu0 0
        %725 = vmatprep.subr.bf16.mxu0 0
        %726 = vmatpush1.bf16.msra.mxu0 0
        %727 = vmatprep.subr.bf16.mxu0 0
        %728 = vmatpush1.bf16.msra.mxu0 0
        %729 = vmatprep.subr.bf16.mxu0 0
        %730 = vmatpush1.bf16.msra.mxu0 0
        %731 = vmatprep.subr.bf16.mxu0 0
        %732 = vmatpush1.bf16.msra.mxu0 0
        %733 = vmatprep.subr.bf16.mxu0 0
        %734 = vmatpush1.bf16.msra.mxu0 0
        %735 = vmatprep.subr.bf16.mxu0 0
        %736 = vmatpush1.bf16.msra.mxu0 0
        %737 = vmatprep.subr.bf16.mxu0 0
        %738 = vmatpush1.bf16.msra.mxu0 0
        %739 = vmatprep.subr.bf16.mxu0 0
        %740 = vmatpush1.bf16.msra.mxu0 0
        %741 = vmatprep.subr.bf16.mxu0 0
        %742 = vmatpush1.bf16.msra.mxu0 0
        %743 = vmatprep.subr.bf16.mxu0 0
        %744 = vmatpush1.bf16.msra.mxu0 0
        %745 = vmatprep.subr.bf16.mxu0 0
        %746 = vmatpush1.bf16.msra.mxu0 0
        %747 = vmatprep.subr.bf16.mxu0 0
        %748 = vmatpush1.bf16.msra.mxu0 0
        %749 = vmatprep.subr.bf16.mxu0 0
        %750 = vmatpush1.bf16.msra.mxu0 0
        %751 = vmatprep.mubr.bf16.mxu0 0
        %752 = vmatmul.mubr.bf16.gmra.mrb[0].mxu0 %v714
        %v753 = vpop.f32.mrb[0].mxu0
        %v754 = vadd.f32 0.0, %v753
        %v755 = vpop.f32.mrb[0].mxu0
        %v756 = vpop.f32.mrb[0].mxu0
        %v757 = vpop.f32.mrb[0].mxu0
        %758 = vdwg.mxu0
        %759 = vrot.lane.b32.xlu0 %v357, 64
        %v760 = vpop.permute.xlu0 %759
        %v762 = vsel %vm361, %v613, 0
        %v765 = vsel %vm619, %v760, 0
        %767 = vmatprep.subr.bf16.mxu0 0
        %768 = vmatpush1.bf16.msra.mxu0 %v765
        %769 = vmatprep.subr.bf16.mxu0 0
        %770 = vmatpush1.bf16.msra.mxu0 0
        %771 = vmatprep.subr.bf16.mxu0 0
        %772 = vmatpush1.bf16.msra.mxu0 0
        %773 = vmatprep.subr.bf16.mxu0 0
        %774 = vmatpush1.bf16.msra.mxu0 0
        %775 = vmatprep.subr.bf16.mxu0 0
        %776 = vmatpush1.bf16.msra.mxu0 0
        %777 = vmatprep.subr.bf16.mxu0 0
        %778 = vmatpush1.bf16.msra.mxu0 0
        %779 = vmatprep.subr.bf16.mxu0 0
        %780 = vmatpush1.bf16.msra.mxu0 0
        %781 = vmatprep.subr.bf16.mxu0 0
        %782 = vmatpush1.bf16.msra.mxu0 0
        %783 = vmatprep.subr.bf16.mxu0 0
        %784 = vmatpush1.bf16.msra.mxu0 0
        %785 = vmatprep.subr.bf16.mxu0 0
        %786 = vmatpush1.bf16.msra.mxu0 0
        %787 = vmatprep.subr.bf16.mxu0 0
        %788 = vmatpush1.bf16.msra.mxu0 0
        %789 = vmatprep.subr.bf16.mxu0 0
        %790 = vmatpush1.bf16.msra.mxu0 0
        %791 = vmatprep.subr.bf16.mxu0 0
        %792 = vmatpush1.bf16.msra.mxu0 0
        %793 = vmatprep.subr.bf16.mxu0 0
        %794 = vmatpush1.bf16.msra.mxu0 0
        %795 = vmatprep.subr.bf16.mxu0 0
        %796 = vmatpush1.bf16.msra.mxu0 0
        %797 = vmatprep.subr.bf16.mxu0 0
        %798 = vmatpush1.bf16.msra.mxu0 0
        %799 = vmatprep.mubr.bf16.mxu0 0
        %800 = vmatmul.mubr.bf16.gmra.mrb[0].mxu0 %v762
        %v801 = vpop.f32.mrb[0].mxu0
        %v802 = vadd.f32 0.0, %v801
        %v803 = vpop.f32.mrb[0].mxu0
        %v804 = vpop.f32.mrb[0].mxu0
        %v805 = vpop.f32.mrb[0].mxu0
        %806 = vdwg.mxu0
        %808 = vrot.lane.b32.xlu0 %v706, 8
        %v809 = vpop.permute.xlu0 %808
        %812 = vrot.lane.b32.xlu0 %v754, 16
        %v813 = vpop.permute.xlu0 %812
        %816 = vrot.lane.b32.xlu0 %v802, 24
        %v817 = vpop.permute.xlu0 %816
        %v819 = vsel %vm361, %v658, %v809
        %vm820 = vcmask 130048
        %v821 = vsel %vm820, %v819, %v813
        %vm822 = vcmask 195584
        %v823 = vsel %vm822, %v821, %v817
        %v824 = vpack.c.bf16 %v823, %v823
        %v825 = vlaneseq
        %v826 = vshrl.u32 %v825, 7
        %v827 = vsub.s32 4, %v826
        %v828 = vrot.slane %v215, %v827
        %v833 = vunpack.c.l.b16 %v224
        %v834 = vunpack.c.l.b16 %v225
        %v835 = vunpack.c.l.b16 %v226
        %v836 = vunpack.c.l.b16 %v227
        %v837 = vpack.c.b16 %v834, %v833
        %v838 = vpack.c.b16 %v836, %v835
        %v842 = vsel %vm244, %v824, 0
        %844 = vmatprep.subr.bf16.mxu0 0
        %845 = vmatpush1.bf16.msra.mxu0 %v837
        %846 = vmatprep.subr.bf16.mxu0 0
        %847 = vmatpush1.bf16.msra.mxu0 %v838
        %848 = vmatprep.subr.bf16.mxu0 0
        %849 = vmatpush1.bf16.msra.mxu0 0
        %850 = vmatprep.subr.bf16.mxu0 0
        %851 = vmatpush1.bf16.msra.mxu0 0
        %852 = vmatprep.subr.bf16.mxu0 0
        %853 = vmatpush1.bf16.msra.mxu0 0
        %854 = vmatprep.subr.bf16.mxu0 0
        %855 = vmatpush1.bf16.msra.mxu0 0
        %856 = vmatprep.subr.bf16.mxu0 0
        %857 = vmatpush1.bf16.msra.mxu0 0
        %858 = vmatprep.subr.bf16.mxu0 0
        %859 = vmatpush1.bf16.msra.mxu0 0
        %860 = vmatprep.subr.bf16.mxu0 0
        %861 = vmatpush1.bf16.msra.mxu0 0
        %862 = vmatprep.subr.bf16.mxu0 0
        %863 = vmatpush1.bf16.msra.mxu0 0
        %864 = vmatprep.subr.bf16.mxu0 0
        %865 = vmatpush1.bf16.msra.mxu0 0
        %866 = vmatprep.subr.bf16.mxu0 0
        %867 = vmatpush1.bf16.msra.mxu0 0
        %868 = vmatprep.subr.bf16.mxu0 0
        %869 = vmatpush1.bf16.msra.mxu0 0
        %870 = vmatprep.subr.bf16.mxu0 0
        %871 = vmatpush1.bf16.msra.mxu0 0
        %872 = vmatprep.subr.bf16.mxu0 0
        %873 = vmatpush1.bf16.msra.mxu0 0
        %874 = vmatprep.subr.bf16.mxu0 0
        %875 = vmatpush1.bf16.msra.mxu0 0
        %876 = vmatprep.mubr.bf16.mxu0 0
        %877 = vmatmul.mubr.bf16.gmra.mrb[0].mxu0 %v842
        %v878 = vpop.f32.mrb[0].mxu0
        %v879 = vadd.f32 %v828, %v878
        %v880 = vpop.f32.mrb[0].mxu0
        %v881 = vpop.f32.mrb[0].mxu0
        %v882 = vpop.f32.mrb[0].mxu0
        %883 = vdwg.mxu0
        %v884 = vadd.f32 %v214, %v879
        %v885 = vsel %vm244, %v884, 0.0
        %886 = vadd.xlane.f32.xlu0 %v885
        %v887 = vpop.xlane.xlu0 %886
        %v888 = vmul.f32 %v887, %v248
        %v889 = vsub.f32 %v884, %v888
        %v890 = vmul.f32 %v889, %v889
        %v891 = vsel %vm244, %v890, 0.0
        %892 = vadd.xlane.f32.xlu0 %v891
        %v893 = vpop.xlane.xlu0 %892
        %v894 = vmul.f32 %v893, %v248
        %v895 = vadd.f32 %v894, 1e-05
        %v896 = vrsqrt.pop %v895
        %v897 = vmul.f32 %v889, %v896
        %v898 = vlaneseq
        %v899 = vshrl.u32 %v898, 7
        %v900 = vsub.s32 2, %v899
        %v901 = vrot.slane %v215, %v900
        %v902 = vmul.f32 %v897, %v901
        %v903 = vlaneseq
        %v904 = vshrl.u32 %v903, 7
        %v905 = vsub.s32 3, %v904
        %v906 = vrot.slane %v215, %v905
        %v907 = vadd.f32 %v902, %v906
        %v908 = vpack.c.bf16 %v907, %v907
        %v909 = vlaneseq
        %v910 = vshrl.u32 %v909, 7
        %v911 = vsub.s32 7, %v910
        %v912 = vrot.slane %v215, %v911
        %v917 = vunpack.c.l.b16 %v216
        %v918 = vunpack.c.l.b16 %v217
        %v919 = vunpack.c.l.b16 %v218
        %v920 = vunpack.c.l.b16 %v219
        %v921 = vpack.c.b16 %v918, %v917
        %v922 = vpack.c.b16 %v920, %v919
        %v926 = vsel %vm244, %v908, 0
        %928 = vmatprep.subr.bf16.mxu0 0
        %929 = vmatpush1.bf16.msra.mxu0 %v921
        %930 = vmatprep.subr.bf16.mxu0 0
        %931 = vmatpush1.bf16.msra.mxu0 %v922
        %932 = vmatprep.subr.bf16.mxu0 0
        %933 = vmatpush1.bf16.msra.mxu0 0
        %934 = vmatprep.subr.bf16.mxu0 0
        %935 = vmatpush1.bf16.msra.mxu0 0
        %936 = vmatprep.subr.bf16.mxu0 0
        %937 = vmatpush1.bf16.msra.mxu0 0
        %938 = vmatprep.subr.bf16.mxu0 0
        %939 = vmatpush1.bf16.msra.mxu0 0
        %940 = vmatprep.subr.bf16.mxu0 0
        %941 = vmatpush1.bf16.msra.mxu0 0
        %942 = vmatprep.subr.bf16.mxu0 0
        %943 = vmatpush1.bf16.msra.mxu0 0
        %944 = vmatprep.subr.bf16.mxu0 0
        %945 = vmatpush1.bf16.msra.mxu0 0
        %946 = vmatprep.subr.bf16.mxu0 0
        %947 = vmatpush1.bf16.msra.mxu0 0
        %948 = vmatprep.subr.bf16.mxu0 0
        %949 = vmatpush1.bf16.msra.mxu0 0
        %950 = vmatprep.subr.bf16.mxu0 0
        %951 = vmatpush1.bf16.msra.mxu0 0
        %952 = vmatprep.subr.bf16.mxu0 0
        %953 = vmatpush1.bf16.msra.mxu0 0
        %954 = vmatprep.subr.bf16.mxu0 0
        %955 = vmatpush1.bf16.msra.mxu0 0
        %956 = vmatprep.subr.bf16.mxu0 0
        %957 = vmatpush1.bf16.msra.mxu0 0
        %958 = vmatprep.subr.bf16.mxu0 0
        %959 = vmatpush1.bf16.msra.mxu0 0
        %960 = vmatprep.mubr.bf16.mxu0 0
        %961 = vmatmul.mubr.bf16.gmra.mrb[0].mxu0 %v926
        %v962 = vpop.f32.mrb[0].mxu0
        %v963 = vadd.f32 %v912, %v962
        %v964 = vpop.f32.mrb[0].mxu0
        %v965 = vpop.f32.mrb[0].mxu0
        %v966 = vpop.f32.mrb[0].mxu0
        %967 = vdwg.mxu0
        %v968 = vmul.f32 %v963, 0.5
        %v969 = vmul.f32 %v963, 0.044715
        %v970 = vmul.f32 %v969, %v963
        %v971 = vmul.f32 %v970, %v963
        %v972 = vadd.f32 %v963, %v971
        %v973 = vmul.f32 %v972, 0.7978846
        %v974 = vtanh.pop %v973
        %v975 = vadd.f32 %v974, 1.0
        %v976 = vmul.f32 %v968, %v975
        %v977 = vpack.c.bf16 %v976, %v976
        %v978 = vlaneseq
        %v979 = vshrl.u32 %v978, 7
        %v980 = vsub.s32 5, %v979
        %v981 = vrot.slane %v215, %v980
        %v998 = vunpack.c.l.b16 %v228
        %v999 = vunpack.c.l.b16 %v229
        %v1000 = vunpack.c.l.b16 %v230
        %v1001 = vunpack.c.l.b16 %v231
        %v1002 = vunpack.c.l.b16 %v232
        %v1003 = vunpack.c.l.b16 %v233
        %v1004 = vunpack.c.l.b16 %v234
        %v1005 = vunpack.c.l.b16 %v235
        %v1006 = vunpack.c.l.b16 %v236
        %v1007 = vunpack.c.l.b16 %v237
        %v1008 = vunpack.c.l.b16 %v238
        %v1009 = vunpack.c.l.b16 %v239
        %v1010 = vunpack.c.l.b16 %v240
        %v1011 = vunpack.c.l.b16 %v241
        %v1012 = vunpack.c.l.b16 %v242
        %v1013 = vunpack.c.l.b16 %v243
        %v1014 = vpack.c.b16 %v999, %v998
        %v1015 = vpack.c.b16 %v1001, %v1000
        %v1016 = vpack.c.b16 %v1003, %v1002
        %v1017 = vpack.c.b16 %v1005, %v1004
        %v1018 = vpack.c.b16 %v1007, %v1006
        %v1019 = vpack.c.b16 %v1009, %v1008
        %v1020 = vpack.c.b16 %v1011, %v1010
        %v1021 = vpack.c.b16 %v1013, %v1012
        %1030 = vmatprep.subr.bf16.mxu0 0
        %1031 = vmatpush1.bf16.msra.mxu0 %v1014
        %1032 = vmatprep.subr.bf16.mxu0 0
        %1033 = vmatpush1.bf16.msra.mxu0 %v1015
        %1034 = vmatprep.subr.bf16.mxu0 0
        %1035 = vmatpush1.bf16.msra.mxu0 %v1016
        %1036 = vmatprep.subr.bf16.mxu0 0
        %1037 = vmatpush1.bf16.msra.mxu0 %v1017
        %1038 = vmatprep.subr.bf16.mxu0 0
        %1039 = vmatpush1.bf16.msra.mxu0 %v1018
        %1040 = vmatprep.subr.bf16.mxu0 0
        %1041 = vmatpush1.bf16.msra.mxu0 %v1019
        %1042 = vmatprep.subr.bf16.mxu0 0
        %1043 = vmatpush1.bf16.msra.mxu0 %v1020
        %1044 = vmatprep.subr.bf16.mxu0 0
        %1045 = vmatpush1.bf16.msra.mxu0 %v1021
        %1046 = vmatprep.subr.bf16.mxu0 0
        %1047 = vmatpush1.bf16.msra.mxu0 0
        %1048 = vmatprep.subr.bf16.mxu0 0
        %1049 = vmatpush1.bf16.msra.mxu0 0
        %1050 = vmatprep.subr.bf16.mxu0 0
        %1051 = vmatpush1.bf16.msra.mxu0 0
        %1052 = vmatprep.subr.bf16.mxu0 0
        %1053 = vmatpush1.bf16.msra.mxu0 0
        %1054 = vmatprep.subr.bf16.mxu0 0
        %1055 = vmatpush1.bf16.msra.mxu0 0
        %1056 = vmatprep.subr.bf16.mxu0 0
        %1057 = vmatpush1.bf16.msra.mxu0 0
        %1058 = vmatprep.subr.bf16.mxu0 0
        %1059 = vmatpush1.bf16.msra.mxu0 0
        %1060 = vmatprep.subr.bf16.mxu0 0
        %1061 = vmatpush1.bf16.msra.mxu0 0
        %1062 = vmatprep.mubr.bf16.mxu0 0
        %1063 = vmatmul.mubr.bf16.gmra.mrb[0].mxu0 %v977
        %v1064 = vpop.f32.mrb[0].mxu0
        %v1065 = vadd.f32 %v981, %v1064
        %v1066 = vpop.f32.mrb[0].mxu0
        %v1067 = vpop.f32.mrb[0].mxu0
        %v1068 = vpop.f32.mrb[0].mxu0
        %1069 = vdwg.mxu0
        %v1070 = vadd.f32 %v884, %v1065
        %1071 = vst.msk [vmem:[%s212] sm:$0xff] %vm244, %v1070
        %s1072 = sand.u32 %s97, 1
        %s1073 = scalar_lea.sflag [#allocation4], %s1072
        %s1074 = sand.u32 %s97, 1
        %s1075 = smul.addr %s1074, 8
        %s1076 = scalar_lea.vmem [#allocation8], %s1075
        // Predicated region
        $region45: #{tpu_custom_call.1} parent=31 // pred_check
          %p1077 = pneg %p107
        $region46: #{tpu_custom_call.1} parent=31 // pred_check_branch
          %1079 = sbr.rel (%p1077) target = $region48
        $region47: #{tpu_custom_call.1} parent=31 // pred_region
          %s1081 = ssub.s32 128, 128
          %1082 = vsyncadd %s1073, %s1081
          %s1083 = smul.addr %s21, 128
          %s1084 = scalar_lea.hbm %s3, %s1083
          %s1086 = sshll.u32 %s1076, 4
          %s1087 = int_to_ptr.vmem [resolvable:$true] %s1086
          %1089 = dma.vmem_to_hbm [thread:$0]  %s1087, 128, %s1084, %s1073
        $region48: #{tpu_custom_call.1} parent=31 // pred_fallthru
          _
      $region32: #{tpu_custom_call.1} parent=5 // pred_fallthru
        _
      %p1090 = scmp.le.s32.totalorder 2, %s16
      // Predicated region
      $region49: #{tpu_custom_call.1} parent=5 // pred_check
        %p1091 = pneg %p1090
      $region50: #{tpu_custom_call.1} parent=5 // pred_check_branch
        %1093 = sbr.rel (%p1091) target = $region52
      $region51: #{tpu_custom_call.1} parent=5 // pred_region
        %s1094 = ssub.s32 %s16, 2
        // Predicated region
        $region53: #{tpu_custom_call.1} parent=51 // pred_check
          %p1095 = pneg %p113
        $region54: #{tpu_custom_call.1} parent=51 // pred_check_branch
          %1097 = sbr.rel (%p1095) target = $region56
        $region55: #{tpu_custom_call.1} parent=51 // pred_region
          %s1098 = sand.u32 %s98, 1
          %s1099 = scalar_lea.sflag [#allocation4], %s1098
          %s1100 = sand.u32 %s98, 1
          %s1101 = smul.addr %s1100, 8
          %s1102 = scalar_lea.vmem [#allocation8], %s1101
          %1103 = dma.done %s1099, 128
        $region56: #{tpu_custom_call.1} parent=51 // pred_fallthru
          _
      $region52: #{tpu_custom_call.1} parent=5 // pred_fallthru
        _
    $region6: #{tpu_custom_call.1} parent=1 // loop_footer
      %s20 = sadd.s32 1, %s16
    $region7: #{tpu_custom_call.1} parent=1 // loop_footer_branch
      %15 = sbr.rel target = $region3
    $region8: #{tpu_custom_call.1} parent=1 // loop_exit
      _
    %1104 = vsyncpa [#allocation3], 1
    %s1105 = scalar_lea.sflag [#allocation3], 1
    %1106 = vsyncpa %s1105, 1
    %1107 = vsyncpa [#allocation6], 1
    %1108 = vsyncpa [#allocation4], 1
    %s1109 = scalar_lea.sflag [#allocation4], 1
    %1110 = vsyncpa %s1109, 1

</llo_original>
